<compile_context>
chip_gen: v7x
topology: tpu7x:2x2x1
jax: 0.10.0
libtpu: 0.0.40
codegen_flags: <defaults>
</compile_context>

<pallas_src>
import functools

import jax
import jax.numpy as jnp
from jax.experimental import pallas as pl
from jax.experimental.pallas import tpu as pltpu

EPS = 0.0  # GINConv default (train_eps=False)
# TODO(synk): if train_eps is ever enabled, pass eps as an SMEM scalar instead of a constant.


def _round_up(v, m):
    return (v + m - 1) // m * m


def _pick_tile(n, cap):
    """Smallest power-of-two multiple of 128 covering n, capped at `cap`."""
    t = 128
    while t < cap and t < n:
        t *= 2
    return min(t, cap)


def _na_disen_kernel(*refs, with_linear):
    if with_linear:
        (a_ref, xk_ref, xi_ref, w1_ref, b1_ref, w2_ref, b2_ref,
         wl_ref, bl_ref, o_ref, acc_ref) = refs
    else:
        (a_ref, xk_ref, w1_ref, b1_ref, w2_ref, b2_ref, o_ref, acc_ref) = refs

    j = pl.program_id(1)

    @pl.when(j == 0)
    def _():
        acc_ref[...] = jnp.zeros_like(acc_ref)

    # GIN self term is folded into A's diagonal in the wrapper, so this reduction computes
    # (A + (1+eps)I) @ x directly.  A and x are already in the compute dtype (bf16 fast
    # path / f32 exact path); accumulation is always f32.
    acc_ref[...] += jnp.dot(a_ref[...], xk_ref[...],
                            preferred_element_type=jnp.float32)

    @pl.when(j == pl.num_programs(1) - 1)
    def _():
        cdt = w1_ref.dtype
        h = acc_ref[...].astype(cdt)
        # Block-diagonal GIN MLP: Linear -> ReLU -> Linear (compute-dtype in, f32 acc).
        h1 = jnp.dot(h, w1_ref[...], preferred_element_type=jnp.float32) + b1_ref[...]
        h1 = jnp.maximum(h1, 0.0)
        out = jnp.dot(h1.astype(cdt), w2_ref[...],
                      preferred_element_type=jnp.float32) + b2_ref[...]
        if with_linear:
            out = out + jnp.dot(xi_ref[...], wl_ref[...],
                                preferred_element_type=jnp.float32) + bl_ref[...]
        o_ref[...] = out.astype(o_ref.dtype)


def na_disen_op(x, edge_index, edge_weights, edge_attr, params,
                with_linear=True, k=4, compute_dtype=jnp.bfloat16):
    """Pallas implementation of NaDisenOp.forward.

    x:            [N, in_dim]  float32 node features
    edge_index:   [2, E]       int32   (row 0 = src, row 1 = dst)
    edge_weights: [E]          float32
    edge_attr:    unused by the 'gin' aggregator in the reference module.
    params:       dict of length-k per-chunk weight lists (see init_params).
    compute_dtype: jnp.bfloat16 (fast, memory-bound path) or jnp.float32 (exact path).
    """
    # TODO(synk): edge_attr is not consumed by the 'gin' aggregator in the reference; ignored.
    del edge_attr
    n, in_dim = x.shape
    out_dim = params["w2"][0].shape[1] * k
    assert in_dim % k == 0 and out_dim % k == 0

    # ---- Fuse the k per-chunk weights into block-diagonal matrices (cast once). ----
    # TODO(synk): for per-chunk dims >= 128, switch to a [k, in_c, out_c] stacked einsum to
    # avoid the (k-1)/k zero-multiply waste of the block-diagonal form.
    w1 = jax.scipy.linalg.block_diag(*params["w1"])   # [in_dim,  out_dim]
    w2 = jax.scipy.linalg.block_diag(*params["w2"])   # [out_dim, out_dim]
    b1 = jnp.concatenate(params["b1"])[None, :]       # [1, out_dim]
    b2 = jnp.concatenate(params["b2"])[None, :]

    di_p = _round_up(in_dim, 128)
    do_p = _round_up(out_dim, 128)

    # ---- Tile sizes: large tiles to amortize the ~0.35 us/step grid overhead; n is padded
    # to a multiple of the tiles so the 128-wide fallback never fires. ----
    tm = _pick_tile(n, 512)      # output row tile ("parallel"; even row-grid for v7x megacore)
    tk = _pick_tile(n, 1024)     # src / reduction tile (last axis, "arbitrary")
    n_p = _round_up(n, max(tm, tk))
    grid = (n_p // tm, n_p // tk)

    def pad2(a, r, c, dt):
        return jnp.pad(a, ((0, r - a.shape[0]), (0, c - a.shape[1]))).astype(dt)

    x_p = pad2(x, n_p, di_p, compute_dtype)            # streamed operand: cast ONCE here
    w1_p = pad2(w1, di_p, do_p, compute_dtype)
    w2_p = pad2(w2, do_p, do_p, compute_dtype)
    b1_p = pad2(b1, 1, do_p, jnp.float32)              # biases stay f32 (added post f32 acc)
    b2_p = pad2(b2, 1, do_p, jnp.float32)

    # Dense adjacency with summed edge weights: A[dst, src] = sum_e w_e, plus (1+eps) on the
    # diagonal so the kernel reduction yields the full GIN pre-activation in one pass.
    # TODO(synk): for large sparse graphs replace with a CSR / scalar-prefetch gather kernel
    # so HBM traffic scales with E instead of N^2.
    src, dst = edge_index[0], edge_index[1]
    adj = jnp.zeros((n_p, n_p), jnp.float32).at[dst, src].add(
        edge_weights.astype(jnp.float32))
    diag = jnp.arange(n)
    adj = adj.at[diag, diag].add(1.0 + EPS)
    # TODO(synk): on v7x the MXU accepts fp8; adj could be stored as e4m3 to halve HBM again.
    adj = adj.astype(compute_dtype)

    in_specs = [
        pl.BlockSpec((tm, tk), lambda i, j: (i, j)),        # A tile
        pl.BlockSpec((tk, di_p), lambda i, j: (j, 0)),      # x[src tile]
    ]
    operands = [adj, x_p]
    if with_linear:
        in_specs.append(pl.BlockSpec((tm, di_p), lambda i, j: (i, 0)))   # x[row tile]
        operands.append(x_p)
    in_specs += [
        pl.BlockSpec((di_p, do_p), lambda i, j: (0, 0)),    # W1 (VMEM-resident)
        pl.BlockSpec((1, do_p), lambda i, j: (0, 0)),       # b1
        pl.BlockSpec((do_p, do_p), lambda i, j: (0, 0)),    # W2
        pl.BlockSpec((1, do_p), lambda i, j: (0, 0)),       # b2
    ]
    operands += [w1_p, b1_p, w2_p, b2_p]
    if with_linear:
        wl = jax.scipy.linalg.block_diag(*params["wl"])
        bl = jnp.concatenate(params["bl"])[None, :]
        wl_p = pad2(wl, di_p, do_p, compute_dtype)
        bl_p = pad2(bl, 1, do_p, jnp.float32)
        in_specs += [
            pl.BlockSpec((di_p, do_p), lambda i, j: (0, 0)),  # Wl
            pl.BlockSpec((1, do_p), lambda i, j: (0, 0)),     # bl
        ]
        operands += [wl_p, bl_p]

    kernel = functools.partial(_na_disen_kernel, with_linear=with_linear)

    out_p = pl.pallas_call(
        kernel,
        out_shape=jax.ShapeDtypeStruct((n_p, do_p), jnp.float32),
        grid_spec=pltpu.PrefetchScalarGridSpec(
            num_scalar_prefetch=0,
            grid=grid,
            in_specs=in_specs,
            out_specs=pl.BlockSpec((tm, do_p), lambda i, j: (i, 0)),
            scratch_shapes=[pltpu.VMEM((tm, di_p), jnp.float32)],   # agg accumulator
        ),
        compiler_params=pltpu.CompilerParams(
            dimension_semantics=("parallel", "arbitrary"),
            vmem_limit_bytes=48 * 1024 * 1024,   # fits v7x's 64 MiB; ample on v5e/v6e
        ),
    )(*operands)

    # Padded output rows carry bias-propagated values (not zeros); slice them off here.
    return out_p[:n, :out_dim]


def init_params(key, in_dim, out_dim, k=4):
    """Per-chunk GIN-MLP + per-chunk linear weights (PyTorch default uniform init)."""
    in_c, out_c = in_dim // k, out_dim // k
    keys = jax.random.split(key, 6 * k)
    s1 = 1.0 / jnp.sqrt(in_c)
    s2 = 1.0 / jnp.sqrt(out_c)
    p = {"w1": [], "b1": [], "w2": [], "b2": [], "wl": [], "bl": []}
    for i in range(k):
        ks = keys[6 * i:6 * (i + 1)]
        p["w1"].append(jax.random.uniform(ks[0], (in_c, out_c), jnp.float32, -s1, s1))
        p["b1"].append(jax.random.uniform(ks[1], (out_c,), jnp.float32, -s1, s1))
        p["w2"].append(jax.random.uniform(ks[2], (out_c, out_c), jnp.float32, -s2, s2))
        p["b2"].append(jax.random.uniform(ks[3], (out_c,), jnp.float32, -s2, s2))
        # TODO(synk): original module declares nn.Linear(in_dim, out_dim) but applies it to an
        # (in_dim // k)-wide chunk (shape mismatch in PyTorch); implemented as the consistent
        # per-chunk Linear(in_dim // k, out_dim // k).
        p["wl"].append(jax.random.uniform(ks[4], (in_c, out_c), jnp.float32, -s1, s1))
        p["bl"].append(jax.random.uniform(ks[5], (out_c,), jnp.float32, -s1, s1))
    return p


def _reference(x, edge_index, edge_weights, params, with_linear, k):
    """Pure-JAX reference matching the PyTorch forward (hsplit -> per-chunk gin -> hstack)."""
    n = x.shape[0]
    src, dst = edge_index[0], edge_index[1]
    adj = jnp.zeros((n, n), jnp.float32).at[dst, src].add(
        edge_weights.astype(jnp.float32))
    xs = jnp.split(x, k, axis=1)
    outs = []
    for i in range(k):
        xi = xs[i]
        h = (1.0 + EPS) * xi + adj @ xi
        h1 = jnp.maximum(h @ params["w1"][i] + params["b1"][i], 0.0)
        z = h1 @ params["w2"][i] + params["b2"][i]
        if with_linear:
            z = z + xi @ params["wl"][i] + params["bl"][i]
        outs.append(z)
    return jnp.concatenate(outs, axis=1)


if __name__ == "__main__":
    key = jax.random.PRNGKey(0)
    k_x, k_ei, k_ew, k_ea, k_p = jax.random.split(key, 5)

    N, IN_DIM, OUT_DIM, E, K = 16, 32, 32, 40, 4
    x = jax.random.normal(k_x, (N, IN_DIM), jnp.float32)
    edge_index = jax.random.randint(k_ei, (2, E), 0, N, jnp.int32)
    edge_weights = jax.random.uniform(k_ew, (E,), jnp.float32)
    edge_attr = jax.random.normal(k_ea, (E, 8), jnp.float32)  # unused by 'gin'
    params = init_params(k_p, IN_DIM, OUT_DIM, K)

    ref_lin = _reference(x, edge_index, edge_weights, params, True, K)
    ref_nolin = _reference(x, edge_index, edge_weights, params, False, K)

    # Exact f32 path (with per-chunk linear).
    out_f32 = na_disen_op(x, edge_index, edge_weights, edge_attr, params,
                          with_linear=True, k=K, compute_dtype=jnp.float32)
    out_f32 = jax.block_until_ready(out_f32)
    assert out_f32.shape == (N, OUT_DIM)
    assert jnp.allclose(out_f32, ref_lin, atol=2e-3, rtol=2e-3)

    # Exact f32 path, with_linear=False (exercises the conditional operand list).
    out_nolin = na_disen_op(x, edge_index, edge_weights, edge_attr, params,
                            with_linear=False, k=K, compute_dtype=jnp.float32)
    out_nolin = jax.block_until_ready(out_nolin)
    assert out_nolin.shape == (N, OUT_DIM)
    assert jnp.allclose(out_nolin, ref_nolin, atol=2e-3, rtol=2e-3)

    # bf16 fast path: A, x and weights stored/streamed in bf16, f32 accumulation.
    # Looser tolerance due to bf16 rounding of the operands.
    out_bf16 = na_disen_op(x, edge_index, edge_weights, edge_attr, params,
                           with_linear=True, k=K, compute_dtype=jnp.bfloat16)
    out_bf16 = jax.block_until_ready(out_bf16)
    assert out_bf16.shape == (N, OUT_DIM)
    assert jnp.allclose(out_bf16, ref_lin, atol=1e-1, rtol=5e-2)

    print("KERNEL_OK")
</pallas_src>

<mosaic_0001>
module attributes {stable_mosaic.version = 11 : i64} {
  func.func @_na_disen_kernel(%arg0: i32, %arg1: i32, %arg2: memref<128x128xf32, #tpu.memory_space<vmem>>, %arg3: memref<128x128xf32, #tpu.memory_space<vmem>>, %arg4: memref<128x128xf32, #tpu.memory_space<vmem>>, %arg5: memref<128x128xf32, #tpu.memory_space<vmem>>, %arg6: memref<1x128xf32, #tpu.memory_space<vmem>>, %arg7: memref<128x128xf32, #tpu.memory_space<vmem>>, %arg8: memref<1x128xf32, #tpu.memory_space<vmem>>, %arg9: memref<128x128xf32, #tpu.memory_space<vmem>>, %arg10: memref<1x128xf32, #tpu.memory_space<vmem>>, %arg11: memref<128x128xf32, #tpu.memory_space<vmem>>, %arg12: memref<128x128xf32, #tpu.memory_space<vmem>>) attributes {dimension_semantics = [#tpu.dimension_semantics<parallel>, #tpu.dimension_semantics<arbitrary>], iteration_bounds = array<i64: 1, 1>, scalar_prefetch = 0 : i64, scratch_operands = 1 : i64, tpu.core_type = #tpu.core_type<tc>, window_params = [{transform_indices = @transform_0, window_bounds = array<i64: 128, 128>}, {transform_indices = @transform_1, window_bounds = array<i64: 128, 128>}, {transform_indices = @transform_2, window_bounds = array<i64: 128, 128>}, {pipeline_mode = #tpu.pipeline_mode<synchronous>, transform_indices = @transform_3, window_bounds = array<i64: 128, 128>}, {pipeline_mode = #tpu.pipeline_mode<synchronous>, transform_indices = @transform_4, window_bounds = array<i64: 1, 128>}, {pipeline_mode = #tpu.pipeline_mode<synchronous>, transform_indices = @transform_5, window_bounds = array<i64: 128, 128>}, {pipeline_mode = #tpu.pipeline_mode<synchronous>, transform_indices = @transform_6, window_bounds = array<i64: 1, 128>}, {pipeline_mode = #tpu.pipeline_mode<synchronous>, transform_indices = @transform_7, window_bounds = array<i64: 128, 128>}, {pipeline_mode = #tpu.pipeline_mode<synchronous>, transform_indices = @transform_8, window_bounds = array<i64: 1, 128>}, {transform_indices = @transform_9, window_bounds = array<i64: 128, 128>}]} {
    %c0_i32 = arith.constant 0 : i32
    %0 = arith.cmpi eq, %arg1, %c0_i32 : i32
    %1 = arith.extui %0 : i1 to i32
    %c0_i32_0 = arith.constant 0 : i32
    %2 = arith.cmpi ne, %1, %c0_i32_0 : i32
    scf.if %2 {
      %cst_10 = arith.constant 0.000000e+00 : f32
      %12 = vector.broadcast %cst_10 : f32 to vector<128x128xf32>
      %c0_11 = arith.constant 0 : index
      %c0_12 = arith.constant 0 : index
      %13 = vector.load %arg12[%c0_11, %c0_12] : memref<128x128xf32, #tpu.memory_space<vmem>>, vector<128x128xf32>
      tpu.vector_store %arg12[%c0_11, %c0_12], %12 {strides = array<i32>} : memref<128x128xf32, #tpu.memory_space<vmem>>, vector<128x128xf32>,
    } else {
    }
    %c0 = arith.constant 0 : index
    %c0_1 = arith.constant 0 : index
    %3 = vector.load %arg12[%c0, %c0_1] : memref<128x128xf32, #tpu.memory_space<vmem>>, vector<128x128xf32>
    %c0_2 = arith.constant 0 : index
    %c0_3 = arith.constant 0 : index
    %4 = vector.load %arg2[%c0_2, %c0_3] : memref<128x128xf32, #tpu.memory_space<vmem>>, vector<128x128xf32>
    %c0_4 = arith.constant 0 : index
    %c0_5 = arith.constant 0 : index
    %5 = vector.load %arg3[%c0_4, %c0_5] : memref<128x128xf32, #tpu.memory_space<vmem>>, vector<128x128xf32>
    %cst = arith.constant dense<0.000000e+00> : vector<128x128xf32>
    %6 = tpu.matmul %4, %5, %cst {dimension_numbers = #tpu.dot_dimension_numbers<[1], [0], [0], [1], [0, 0, 1, 1], [], []>} : vector<128x128xf32>, vector<128x128xf32>, vector<128x128xf32> -> vector<128x128xf32>
    %7 = arith.addf %3, %6 : vector<128x128xf32>
    %c0_6 = arith.constant 0 : index
    %c0_7 = arith.constant 0 : index
    %8 = vector.load %arg12[%c0_6, %c0_7] : memref<128x128xf32, #tpu.memory_space<vmem>>, vector<128x128xf32>
    tpu.vector_store %arg12[%c0_6, %c0_7], %7 {strides = array<i32>} : memref<128x128xf32, #tpu.memory_space<vmem>>, vector<128x128xf32>,
    %c0_i32_8 = arith.constant 0 : i32
    %9 = arith.cmpi eq, %arg1, %c0_i32_8 : i32
    %10 = arith.extui %9 : i1 to i32
    %c0_i32_9 = arith.constant 0 : i32
    %11 = arith.cmpi ne, %10, %c0_i32_9 : i32
    scf.if %11 {
      %c0_10 = arith.constant 0 : index
      %c0_11 = arith.constant 0 : index
      %12 = vector.load %arg12[%c0_10, %c0_11] : memref<128x128xf32, #tpu.memory_space<vmem>>, vector<128x128xf32>
      %c0_12 = arith.constant 0 : index
      %c0_13 = arith.constant 0 : index
      %13 = vector.load %arg5[%c0_12, %c0_13] : memref<128x128xf32, #tpu.memory_space<vmem>>, vector<128x128xf32>
      %cst_14 = arith.constant dense<0.000000e+00> : vector<128x128xf32>
      %14 = tpu.matmul %12, %13, %cst_14 {dimension_numbers = #tpu.dot_dimension_numbers<[1], [0], [0], [1], [0, 0, 1, 1], [], []>} : vector<128x128xf32>, vector<128x128xf32>, vector<128x128xf32> -> vector<128x128xf32>
      %c0_15 = arith.constant 0 : index
      %c0_16 = arith.constant 0 : index
      %15 = vector.load %arg6[%c0_15, %c0_16] : memref<1x128xf32, #tpu.memory_space<vmem>>, vector<1x128xf32>
      %16 = vector.broadcast %15 : vector<1x128xf32> to vector<128x128xf32>
      %17 = arith.addf %14, %16 : vector<128x128xf32>
      %cst_17 = arith.constant 0.000000e+00 : f32
      %18 = vector.broadcast %cst_17 : f32 to vector<128x128xf32>
      %19 = arith.maximumf %17, %18 : vector<128x128xf32>
      %c0_18 = arith.constant 0 : index
      %c0_19 = arith.constant 0 : index
      %20 = vector.load %arg7[%c0_18, %c0_19] : memref<128x128xf32, #tpu.memory_space<vmem>>, vector<128x128xf32>
      %cst_20 = arith.constant dense<0.000000e+00> : vector<128x128xf32>
      %21 = tpu.matmul %19, %20, %cst_20 {dimension_numbers = #tpu.dot_dimension_numbers<[1], [0], [0], [1], [0, 0, 1, 1], [], []>} : vector<128x128xf32>, vector<128x128xf32>, vector<128x128xf32> -> vector<128x128xf32>
      %c0_21 = arith.constant 0 : index
      %c0_22 = arith.constant 0 : index
      %22 = vector.load %arg8[%c0_21, %c0_22] : memref<1x128xf32, #tpu.memory_space<vmem>>, vector<1x128xf32>
      %23 = vector.broadcast %22 : vector<1x128xf32> to vector<128x128xf32>
      %24 = arith.addf %21, %23 : vector<128x128xf32>
      %c0_23 = arith.constant 0 : index
      %c0_24 = arith.constant 0 : index
      %25 = vector.load %arg4[%c0_23, %c0_24] : memref<128x128xf32, #tpu.memory_space<vmem>>, vector<128x128xf32>
      %c0_25 = arith.constant 0 : index
      %c0_26 = arith.constant 0 : index
      %26 = vector.load %arg9[%c0_25, %c0_26] : memref<128x128xf32, #tpu.memory_space<vmem>>, vector<128x128xf32>
      %cst_27 = arith.constant dense<0.000000e+00> : vector<128x128xf32>
      %27 = tpu.matmul %25, %26, %cst_27 {dimension_numbers = #tpu.dot_dimension_numbers<[1], [0], [0], [1], [0, 0, 1, 1], [], []>} : vector<128x128xf32>, vector<128x128xf32>, vector<128x128xf32> -> vector<128x128xf32>
      %28 = arith.addf %24, %27 : vector<128x128xf32>
      %c0_28 = arith.constant 0 : index
      %c0_29 = arith.constant 0 : index
      %29 = vector.load %arg10[%c0_28, %c0_29] : memref<1x128xf32, #tpu.memory_space<vmem>>, vector<1x128xf32>
      %30 = vector.broadcast %29 : vector<1x128xf32> to vector<128x128xf32>
      %31 = arith.addf %28, %30 : vector<128x128xf32>
      %c0_30 = arith.constant 0 : index
      %c0_31 = arith.constant 0 : index
      %32 = vector.load %arg11[%c0_30, %c0_31] : memref<128x128xf32, #tpu.memory_space<vmem>>, vector<128x128xf32>
      tpu.vector_store %arg11[%c0_30, %c0_31], %31 {strides = array<i32>} : memref<128x128xf32, #tpu.memory_space<vmem>>, vector<128x128xf32>,
    } else {
    }
    return
  }
  func.func @transform_0(%arg0: i32, %arg1: i32) -> (i32, i32) {
    %c0_i32 = arith.constant 0 : i32
    return %arg0, %arg1 : i32, i32
  }
  func.func @transform_1(%arg0: i32, %arg1: i32) -> (i32, i32) {
    %c0_i32 = arith.constant 0 : i32
    %c0_i32_0 = arith.constant 0 : i32
    return %arg1, %c0_i32 : i32, i32
  }
  func.func @transform_2(%arg0: i32, %arg1: i32) -> (i32, i32) {
    %c0_i32 = arith.constant 0 : i32
    %c0_i32_0 = arith.constant 0 : i32
    return %arg0, %c0_i32 : i32, i32
  }
  func.func @transform_3(%arg0: i32, %arg1: i32) -> (i32, i32) {
    %c0_i32 = arith.constant 0 : i32
    %c0_i32_0 = arith.constant 0 : i32
    %c0_i32_1 = arith.constant 0 : i32
    return %c0_i32, %c0_i32_0 : i32, i32
  }
  func.func @transform_4(%arg0: i32, %arg1: i32) -> (i32, i32) {
    %c0_i32 = arith.constant 0 : i32
    %c0_i32_0 = arith.constant 0 : i32
    %c0_i32_1 = arith.constant 0 : i32
    return %c0_i32, %c0_i32_0 : i32, i32
  }
  func.func @transform_5(%arg0: i32, %arg1: i32) -> (i32, i32) {
    %c0_i32 = arith.constant 0 : i32
    %c0_i32_0 = arith.constant 0 : i32
    %c0_i32_1 = arith.constant 0 : i32
    return %c0_i32, %c0_i32_0 : i32, i32
  }
  func.func @transform_6(%arg0: i32, %arg1: i32) -> (i32, i32) {
    %c0_i32 = arith.constant 0 : i32
    %c0_i32_0 = arith.constant 0 : i32
    %c0_i32_1 = arith.constant 0 : i32
    return %c0_i32, %c0_i32_0 : i32, i32
  }
  func.func @transform_7(%arg0: i32, %arg1: i32) -> (i32, i32) {
    %c0_i32 = arith.constant 0 : i32
    %c0_i32_0 = arith.constant 0 : i32
    %c0_i32_1 = arith.constant 0 : i32
    return %c0_i32, %c0_i32_0 : i32, i32
  }
  func.func @transform_8(%arg0: i32, %arg1: i32) -> (i32, i32) {
    %c0_i32 = arith.constant 0 : i32
    %c0_i32_0 = arith.constant 0 : i32
    %c0_i32_1 = arith.constant 0 : i32
    return %c0_i32, %c0_i32_0 : i32, i32
  }
  func.func @transform_9(%arg0: i32, %arg1: i32) -> (i32, i32) {
    %c0_i32 = arith.constant 0 : i32
    %c0_i32_0 = arith.constant 0 : i32
    return %arg0, %c0_i32 : i32, i32
  }
}

</mosaic_0001>

<llo_original>
// kernel: tpu_custom_call.1
$region0: #{tpu_custom_call.1}
  #allocation0 [shape = 'u32[]', space=smem, size = 0x4, offset = 0x4, fixed_abs, tag = 'smem constant byte address 0x4 - core index']
  #allocation1 [shape = 'u32[144,128]{1,0:T(1,128)}', space=vmem, size = 0x12000, scoped, tag = 'internal scratch']
  #allocation2 [shape = 'f32[128,128]{1,0:T(8,128)}', space=vmem, size = 0x10000, scoped, tag = 'scratch operand']
  %s0 = inlined_call_operand.hbm [shape: f32[128,128], index: 0, kind: input, shape index: {}]
  %s1 = inlined_call_operand.hbm [shape: f32[128,128], index: 1, kind: input, shape index: {}]
  %s2 = inlined_call_operand.hbm [shape: f32[128,128], index: 2, kind: input, shape index: {}]
  %s3 = inlined_call_operand.hbm [shape: f32[128,128], index: 3, kind: input, shape index: {}]
  %s4 = inlined_call_operand.vmem [shape: f32[1,128], index: 4, kind: input, shape index: {}]
  %s5 = inlined_call_operand.hbm [shape: f32[128,128], index: 5, kind: input, shape index: {}]
  %s6 = inlined_call_operand.vmem [shape: f32[1,128], index: 6, kind: input, shape index: {}]
  %s7 = inlined_call_operand.hbm [shape: f32[128,128], index: 7, kind: input, shape index: {}]
  %s8 = inlined_call_operand.vmem [shape: f32[1,128], index: 8, kind: input, shape index: {}]
  %s9 = inlined_call_operand.hbm [shape: f32[128,128], index: 9, kind: output, shape index: {}]
  %s10 = sld [smem:[#allocation0]]
  $region78: #{tpu_custom_call.1} parent=0
    _
  %s12 = ssub.s32 1, %s10
  %s13 = scalar_select 0, %s12, %s10
  $region1: #{tpu_custom_call.1} parent=0
    #allocation3 [shape = 'u8[65536]{0}', space=vmem, size = 0x10000, scoped, tag = 'input window, operand 0, single buffered']
    #allocation4 [shape = 's32[1]{0}', space=sflag, size = 0x4, scoped, tag = 'scoped memory for tpu_custom_call.1']
    #allocation5 [shape = 's32[1]{0}', space=sflag, size = 0x4, scoped, tag = 'scoped memory for tpu_custom_call.1']
    #allocation6 [shape = 'u8[65536]{0}', space=vmem, size = 0x10000, scoped, tag = 'input window, operand 1, single buffered']
    #allocation7 [shape = 's32[1]{0}', space=sflag, size = 0x4, scoped, tag = 'scoped memory for tpu_custom_call.1']
    #allocation8 [shape = 'u8[65536]{0}', space=vmem, size = 0x10000, scoped, tag = 'input window, operand 2, single buffered']
    #allocation9 [shape = 'u8[65536]{0}', space=vmem, size = 0x10000, scoped, tag = 'input window, operand 3, single buffered']
    #allocation10 [shape = 's32[1]{0}', space=sflag, size = 0x4, scoped, tag = 'scoped memory for tpu_custom_call.1']
    #allocation11 [shape = 'u8[65536]{0}', space=vmem, size = 0x10000, scoped, tag = 'input window, operand 5, single buffered']
    #allocation12 [shape = 'u8[65536]{0}', space=vmem, size = 0x10000, scoped, tag = 'input window, operand 7, single buffered']
    #allocation13 [shape = 's32[1]{0}', space=sflag, size = 0x4, scoped, tag = 'scoped memory for tpu_custom_call.1']
    #allocation14 [shape = 'u8[65536]{0}', space=vmem, size = 0x10000, scoped, tag = 'output window, operand 0, single buffered']
    %14 = vsyncpa [#allocation4], 0
    %15 = vsyncpa [#allocation7], 0
    %16 = vsyncpa [#allocation10], 0
    %17 = vsyncpa [#allocation13], 0
    %18 = vsyncpa [#allocation5], 0
    // Predicated region
    $region2: #{tpu_custom_call.1} parent=1 // pred_check
      _
    $region3: #{tpu_custom_call.1} parent=1 // pred_check_branch
      %20 = sbr.rel (0) target = $region5
    $region4: #{tpu_custom_call.1} parent=1 // pred_region
      %s22 = ssub.s32 2048, 2048
      %23 = vsyncadd [#allocation4], %s22
      %s24 = sshll.u32 [#allocation3], 4
      %s25 = int_to_ptr.vmem [resolvable:$true] %s24
      %30 = dma.hbm_to_vmem [thread:$0]  %s0, 2048, %s25, [#allocation4], 128, 128, 8
    $region5: #{tpu_custom_call.1} parent=1 // pred_fallthru
      _
    // Predicated region
    $region6: #{tpu_custom_call.1} parent=1 // pred_check
      _
    $region7: #{tpu_custom_call.1} parent=1 // pred_check_branch
      %32 = sbr.rel (0) target = $region9
    $region8: #{tpu_custom_call.1} parent=1 // pred_region
      %s34 = ssub.s32 2048, 2048
      %35 = vsyncadd [#allocation7], %s34
      %s36 = sshll.u32 [#allocation6], 4
      %s37 = int_to_ptr.vmem [resolvable:$true] %s36
      %42 = dma.hbm_to_vmem [thread:$0]  %s1, 2048, %s37, [#allocation7], 128, 128, 8
    $region9: #{tpu_custom_call.1} parent=1 // pred_fallthru
      _
    // Predicated region
    $region10: #{tpu_custom_call.1} parent=1 // pred_check
      _
    $region11: #{tpu_custom_call.1} parent=1 // pred_check_branch
      %44 = sbr.rel (0) target = $region13
    $region12: #{tpu_custom_call.1} parent=1 // pred_region
      %s46 = ssub.s32 2048, 2048
      %47 = vsyncadd [#allocation7], %s46
      %s48 = sshll.u32 [#allocation8], 4
      %s49 = int_to_ptr.vmem [resolvable:$true] %s48
      %54 = dma.hbm_to_vmem [thread:$0]  %s2, 2048, %s49, [#allocation7], 128, 128, 8
    $region13: #{tpu_custom_call.1} parent=1 // pred_fallthru
      _
    // Predicated region
    $region14: #{tpu_custom_call.1} parent=1 // pred_check
      _
    $region15: #{tpu_custom_call.1} parent=1 // pred_check_branch
      %56 = sbr.rel (0) target = $region17
    $region16: #{tpu_custom_call.1} parent=1 // pred_region
      %s58 = ssub.s32 2048, 2048
      %59 = vsyncadd [#allocation10], %s58
      %s60 = sshll.u32 [#allocation9], 4
      %s61 = int_to_ptr.vmem [resolvable:$true] %s60
      %66 = dma.hbm_to_vmem [thread:$0]  %s3, 2048, %s61, [#allocation10], 128, 128, 8
    $region17: #{tpu_custom_call.1} parent=1 // pred_fallthru
      _
    // Predicated region
    $region18: #{tpu_custom_call.1} parent=1 // pred_check
      _
    $region19: #{tpu_custom_call.1} parent=1 // pred_check_branch
      %68 = sbr.rel (0) target = $region21
    $region20: #{tpu_custom_call.1} parent=1 // pred_region
      _
    $region21: #{tpu_custom_call.1} parent=1 // pred_fallthru
      _
    // Predicated region
    $region22: #{tpu_custom_call.1} parent=1 // pred_check
      _
    $region23: #{tpu_custom_call.1} parent=1 // pred_check_branch
      %70 = sbr.rel (0) target = $region25
    $region24: #{tpu_custom_call.1} parent=1 // pred_region
      %s72 = ssub.s32 2048, 2048
      %73 = vsyncadd [#allocation10], %s72
      %s74 = sshll.u32 [#allocation11], 4
      %s75 = int_to_ptr.vmem [resolvable:$true] %s74
      %80 = dma.hbm_to_vmem [thread:$0]  %s5, 2048, %s75, [#allocation10], 128, 128, 8
    $region25: #{tpu_custom_call.1} parent=1 // pred_fallthru
      _
    // Predicated region
    $region26: #{tpu_custom_call.1} parent=1 // pred_check
      _
    $region27: #{tpu_custom_call.1} parent=1 // pred_check_branch
      %82 = sbr.rel (0) target = $region29
    $region28: #{tpu_custom_call.1} parent=1 // pred_region
      _
    $region29: #{tpu_custom_call.1} parent=1 // pred_fallthru
      _
    // Predicated region
    $region30: #{tpu_custom_call.1} parent=1 // pred_check
      _
    $region31: #{tpu_custom_call.1} parent=1 // pred_check_branch
      %84 = sbr.rel (0) target = $region33
    $region32: #{tpu_custom_call.1} parent=1 // pred_region
      %s86 = ssub.s32 2048, 2048
      %87 = vsyncadd [#allocation13], %s86
      %s88 = sshll.u32 [#allocation12], 4
      %s89 = int_to_ptr.vmem [resolvable:$true] %s88
      %94 = dma.hbm_to_vmem [thread:$0]  %s7, 2048, %s89, [#allocation13], 128, 128, 8
    $region33: #{tpu_custom_call.1} parent=1 // pred_fallthru
      _
    // Predicated region
    $region34: #{tpu_custom_call.1} parent=1 // pred_check
      _
    $region35: #{tpu_custom_call.1} parent=1 // pred_check_branch
      %96 = sbr.rel (0) target = $region37
    $region36: #{tpu_custom_call.1} parent=1 // pred_region
      _
    $region37: #{tpu_custom_call.1} parent=1 // pred_fallthru
      _
    // Predicated region
    $region38: #{tpu_custom_call.1} parent=1 // pred_check
      _
    $region39: #{tpu_custom_call.1} parent=1 // pred_check_branch
      %98 = sbr.rel (0) target = $region41
    $region40: #{tpu_custom_call.1} parent=1 // pred_region
      %99 = dma.done [#allocation4], 2048
    $region41: #{tpu_custom_call.1} parent=1 // pred_fallthru
      _
    // Predicated region
    $region42: #{tpu_custom_call.1} parent=1 // pred_check
      _
    $region43: #{tpu_custom_call.1} parent=1 // pred_check_branch
      %101 = sbr.rel (0) target = $region45
    $region44: #{tpu_custom_call.1} parent=1 // pred_region
      %102 = dma.done [#allocation7], 2048
    $region45: #{tpu_custom_call.1} parent=1 // pred_fallthru
      _
    // Predicated region
    $region46: #{tpu_custom_call.1} parent=1 // pred_check
      _
    $region47: #{tpu_custom_call.1} parent=1 // pred_check_branch
      %104 = sbr.rel (0) target = $region49
    $region48: #{tpu_custom_call.1} parent=1 // pred_region
      %105 = dma.done [#allocation7], 2048
    $region49: #{tpu_custom_call.1} parent=1 // pred_fallthru
      _
    // Predicated region
    $region50: #{tpu_custom_call.1} parent=1 // pred_check
      _
    $region51: #{tpu_custom_call.1} parent=1 // pred_check_branch
      %107 = sbr.rel (0) target = $region53
    $region52: #{tpu_custom_call.1} parent=1 // pred_region
      %108 = dma.done [#allocation10], 2048
    $region53: #{tpu_custom_call.1} parent=1 // pred_fallthru
      _
    // Predicated region
    $region54: #{tpu_custom_call.1} parent=1 // pred_check
      _
    $region55: #{tpu_custom_call.1} parent=1 // pred_check_branch
      %110 = sbr.rel (0) target = $region57
    $region56: #{tpu_custom_call.1} parent=1 // pred_region
      %111 = dma.done [#allocation10], 2048
    $region57: #{tpu_custom_call.1} parent=1 // pred_fallthru
      _
    // Predicated region
    $region58: #{tpu_custom_call.1} parent=1 // pred_check
      _
    $region59: #{tpu_custom_call.1} parent=1 // pred_check_branch
      %113 = sbr.rel (0) target = $region61
    $region60: #{tpu_custom_call.1} parent=1 // pred_region
      %114 = dma.done [#allocation13], 2048
    $region61: #{tpu_custom_call.1} parent=1 // pred_fallthru
      _
    %p115 = scmp.eq.s32.totalorder 0, 0
    // Predicated region
    $region62: #{tpu_custom_call.1} parent=1 // pred_check
      %p116 = pneg %p115
    $region63: #{tpu_custom_call.1} parent=1 // pred_check_branch
      %118 = sbr.rel (%p116) target = $region65
    $region64: #{tpu_custom_call.1} parent=1 // pred_region
      %119 = vst [vmem:[#allocation2] sm:$0xff] 0.0
      %120 = vst [vmem:[#allocation2 + $0x8] sm:$0xff] 0.0
      %121 = vst [vmem:[#allocation2 + $0x10] sm:$0xff] 0.0
      %122 = vst [vmem:[#allocation2 + $0x18] sm:$0xff] 0.0
      %123 = vst [vmem:[#allocation2 + $0x20] sm:$0xff] 0.0
      %124 = vst [vmem:[#allocation2 + $0x28] sm:$0xff] 0.0
      %125 = vst [vmem:[#allocation2 + $0x30] sm:$0xff] 0.0
      %126 = vst [vmem:[#allocation2 + $0x38] sm:$0xff] 0.0
      %127 = vst [vmem:[#allocation2 + $0x40] sm:$0xff] 0.0
      %128 = vst [vmem:[#allocation2 + $0x48] sm:$0xff] 0.0
      %129 = vst [vmem:[#allocation2 + $0x50] sm:$0xff] 0.0
      %130 = vst [vmem:[#allocation2 + $0x58] sm:$0xff] 0.0
      %131 = vst [vmem:[#allocation2 + $0x60] sm:$0xff] 0.0
      %132 = vst [vmem:[#allocation2 + $0x68] sm:$0xff] 0.0
      %133 = vst [vmem:[#allocation2 + $0x70] sm:$0xff] 0.0
      %134 = vst [vmem:[#allocation2 + $0x78] sm:$0xff] 0.0
    $region65: #{tpu_custom_call.1} parent=1 // pred_fallthru
      _
    %v135 = vld [vmem:[#allocation2] sm:$0xff]
    %v136 = vld [vmem:[#allocation2 + $0x8] sm:$0xff]
    %v137 = vld [vmem:[#allocation2 + $0x10] sm:$0xff]
    %v138 = vld [vmem:[#allocation2 + $0x18] sm:$0xff]
    %v139 = vld [vmem:[#allocation2 + $0x20] sm:$0xff]
    %v140 = vld [vmem:[#allocation2 + $0x28] sm:$0xff]
    %v141 = vld [vmem:[#allocation2 + $0x30] sm:$0xff]
    %v142 = vld [vmem:[#allocation2 + $0x38] sm:$0xff]
    %v143 = vld [vmem:[#allocation2 + $0x40] sm:$0xff]
    %v144 = vld [vmem:[#allocation2 + $0x48] sm:$0xff]
    %v145 = vld [vmem:[#allocation2 + $0x50] sm:$0xff]
    %v146 = vld [vmem:[#allocation2 + $0x58] sm:$0xff]
    %v147 = vld [vmem:[#allocation2 + $0x60] sm:$0xff]
    %v148 = vld [vmem:[#allocation2 + $0x68] sm:$0xff]
    %v149 = vld [vmem:[#allocation2 + $0x70] sm:$0xff]
    %v150 = vld [vmem:[#allocation2 + $0x78] sm:$0xff]
    %v151 = vld [vmem:[#allocation3] sm:$0xff]
    %v152 = vld [vmem:[#allocation3 + $0x8] sm:$0xff]
    %v153 = vld [vmem:[#allocation3 + $0x10] sm:$0xff]
    %v154 = vld [vmem:[#allocation3 + $0x18] sm:$0xff]
    %v155 = vld [vmem:[#allocation3 + $0x20] sm:$0xff]
    %v156 = vld [vmem:[#allocation3 + $0x28] sm:$0xff]
    %v157 = vld [vmem:[#allocation3 + $0x30] sm:$0xff]
    %v158 = vld [vmem:[#allocation3 + $0x38] sm:$0xff]
    %v159 = vld [vmem:[#allocation3 + $0x40] sm:$0xff]
    %v160 = vld [vmem:[#allocation3 + $0x48] sm:$0xff]
    %v161 = vld [vmem:[#allocation3 + $0x50] sm:$0xff]
    %v162 = vld [vmem:[#allocation3 + $0x58] sm:$0xff]
    %v163 = vld [vmem:[#allocation3 + $0x60] sm:$0xff]
    %v164 = vld [vmem:[#allocation3 + $0x68] sm:$0xff]
    %v165 = vld [vmem:[#allocation3 + $0x70] sm:$0xff]
    %v166 = vld [vmem:[#allocation3 + $0x78] sm:$0xff]
    %v167 = vld [vmem:[#allocation6] sm:$0xff]
    %v168 = vld [vmem:[#allocation6 + $0x8] sm:$0xff]
    %v169 = vld [vmem:[#allocation6 + $0x10] sm:$0xff]
    %v170 = vld [vmem:[#allocation6 + $0x18] sm:$0xff]
    %v171 = vld [vmem:[#allocation6 + $0x20] sm:$0xff]
    %v172 = vld [vmem:[#allocation6 + $0x28] sm:$0xff]
    %v173 = vld [vmem:[#allocation6 + $0x30] sm:$0xff]
    %v174 = vld [vmem:[#allocation6 + $0x38] sm:$0xff]
    %v175 = vld [vmem:[#allocation6 + $0x40] sm:$0xff]
    %v176 = vld [vmem:[#allocation6 + $0x48] sm:$0xff]
    %v177 = vld [vmem:[#allocation6 + $0x50] sm:$0xff]
    %v178 = vld [vmem:[#allocation6 + $0x58] sm:$0xff]
    %v179 = vld [vmem:[#allocation6 + $0x60] sm:$0xff]
    %v180 = vld [vmem:[#allocation6 + $0x68] sm:$0xff]
    %v181 = vld [vmem:[#allocation6 + $0x70] sm:$0xff]
    %v182 = vld [vmem:[#allocation6 + $0x78] sm:$0xff]
    %183 = vmatprep.subr.mxu0 0.0
    %184 = vmatpush1.msra.mxu0 %v167
    %185 = vmatprep.subr.mxu0 0.0
    %186 = vmatpush1.msra.mxu0 %v168
    %187 = vmatprep.subr.mxu0 0.0
    %188 = vmatpush1.msra.mxu0 %v169
    %189 = vmatprep.subr.mxu0 0.0
    %190 = vmatpush1.msra.mxu0 %v170
    %191 = vmatprep.subr.mxu0 0.0
    %192 = vmatpush1.msra.mxu0 %v171
    %193 = vmatprep.subr.mxu0 0.0
    %194 = vmatpush1.msra.mxu0 %v172
    %195 = vmatprep.subr.mxu0 0.0
    %196 = vmatpush1.msra.mxu0 %v173
    %197 = vmatprep.subr.mxu0 0.0
    %198 = vmatpush1.msra.mxu0 %v174
    %199 = vmatprep.subr.mxu0 0.0
    %200 = vmatpush1.msra.mxu0 %v175
    %201 = vmatprep.subr.mxu0 0.0
    %202 = vmatpush1.msra.mxu0 %v176
    %203 = vmatprep.subr.mxu0 0.0
    %204 = vmatpush1.msra.mxu0 %v177
    %205 = vmatprep.subr.mxu0 0.0
    %206 = vmatpush1.msra.mxu0 %v178
    %207 = vmatprep.subr.mxu0 0.0
    %208 = vmatpush1.msra.mxu0 %v179
    %209 = vmatprep.subr.mxu0 0.0
    %210 = vmatpush1.msra.mxu0 %v180
    %211 = vmatprep.subr.mxu0 0.0
    %212 = vmatpush1.msra.mxu0 %v181
    %213 = vmatprep.subr.mxu0 0.0
    %214 = vmatpush1.msra.mxu0 %v182
    %215 = vmatprep.subr.mxu0 0.0
    %216 = vmatpush1.msra.mxu0 0.0
    %217 = vmatprep.subr.mxu0 0.0
    %218 = vmatpush1.msra.mxu0 0.0
    %219 = vmatprep.subr.mxu0 0.0
    %220 = vmatpush1.msra.mxu0 0.0
    %221 = vmatprep.subr.mxu0 0.0
    %222 = vmatpush1.msra.mxu0 0.0
    %223 = vmatprep.subr.mxu0 0.0
    %224 = vmatpush1.msra.mxu0 0.0
    %225 = vmatprep.subr.mxu0 0.0
    %226 = vmatpush1.msra.mxu0 0.0
    %227 = vmatprep.subr.mxu0 0.0
    %228 = vmatpush1.msra.mxu0 0.0
    %229 = vmatprep.subr.mxu0 0.0
    %230 = vmatpush1.msra.mxu0 0.0
    %231 = vmatprep.subr.mxu0 0.0
    %232 = vmatpush1.msra.mxu0 0.0
    %233 = vmatprep.subr.mxu0 0.0
    %234 = vmatpush1.msra.mxu0 0.0
    %235 = vmatprep.subr.mxu0 0.0
    %236 = vmatpush1.msra.mxu0 0.0
    %237 = vmatprep.subr.mxu0 0.0
    %238 = vmatpush1.msra.mxu0 0.0
    %239 = vmatprep.subr.mxu0 0.0
    %240 = vmatpush1.msra.mxu0 0.0
    %241 = vmatprep.subr.mxu0 0.0
    %242 = vmatpush1.msra.mxu0 0.0
    %243 = vmatprep.subr.mxu0 0.0
    %244 = vmatpush1.msra.mxu0 0.0
    %245 = vmatprep.subr.mxu0 0.0
    %246 = vmatpush1.msra.mxu0 0.0
    %247 = vmatprep.mubr.f32.mxu0 0.0
    %248 = vmatmul.mubr.f32.gmra.mrb[0].mxu0 %v151
    %v249 = vpop.f32.mrb[0].mxu0
    %v250 = vadd.f32 0.0, %v249
    %v251 = vpop.f32.mrb[0].mxu0
    %252 = vmatprep.mubr.f32.mxu0 0.0
    %253 = vmatmul.mubr.f32.gmra.mrb[0].mxu0 %v152
    %v254 = vpop.f32.mrb[0].mxu0
    %v255 = vadd.f32 0.0, %v254
    %v256 = vpop.f32.mrb[0].mxu0
    %257 = vmatprep.mubr.f32.mxu0 0.0
    %258 = vmatmul.mubr.f32.gmra.mrb[0].mxu0 %v153
    %v259 = vpop.f32.mrb[0].mxu0
    %v260 = vadd.f32 0.0, %v259
    %v261 = vpop.f32.mrb[0].mxu0
    %262 = vmatprep.mubr.f32.mxu0 0.0
    %263 = vmatmul.mubr.f32.gmra.mrb[0].mxu0 %v154
    %v264 = vpop.f32.mrb[0].mxu0
    %v265 = vadd.f32 0.0, %v264
    %v266 = vpop.f32.mrb[0].mxu0
    %267 = vmatprep.mubr.f32.mxu0 0.0
    %268 = vmatmul.mubr.f32.gmra.mrb[0].mxu0 %v155
    %v269 = vpop.f32.mrb[0].mxu0
    %v270 = vadd.f32 0.0, %v269
    %v271 = vpop.f32.mrb[0].mxu0
    %272 = vmatprep.mubr.f32.mxu0 0.0
    %273 = vmatmul.mubr.f32.gmra.mrb[0].mxu0 %v156
    %v274 = vpop.f32.mrb[0].mxu0
    %v275 = vadd.f32 0.0, %v274
    %v276 = vpop.f32.mrb[0].mxu0
    %277 = vmatprep.mubr.f32.mxu0 0.0
    %278 = vmatmul.mubr.f32.gmra.mrb[0].mxu0 %v157
    %v279 = vpop.f32.mrb[0].mxu0
    %v280 = vadd.f32 0.0, %v279
    %v281 = vpop.f32.mrb[0].mxu0
    %282 = vmatprep.mubr.f32.mxu0 0.0
    %283 = vmatmul.mubr.f32.gmra.mrb[0].mxu0 %v158
    %v284 = vpop.f32.mrb[0].mxu0
    %v285 = vadd.f32 0.0, %v284
    %v286 = vpop.f32.mrb[0].mxu0
    %287 = vmatprep.mubr.f32.mxu0 0.0
    %288 = vmatmul.mubr.f32.gmra.mrb[0].mxu0 %v159
    %v289 = vpop.f32.mrb[0].mxu0
    %v290 = vadd.f32 0.0, %v289
    %v291 = vpop.f32.mrb[0].mxu0
    %292 = vmatprep.mubr.f32.mxu0 0.0
    %293 = vmatmul.mubr.f32.gmra.mrb[0].mxu0 %v160
    %v294 = vpop.f32.mrb[0].mxu0
    %v295 = vadd.f32 0.0, %v294
    %v296 = vpop.f32.mrb[0].mxu0
    %297 = vmatprep.mubr.f32.mxu0 0.0
    %298 = vmatmul.mubr.f32.gmra.mrb[0].mxu0 %v161
    %v299 = vpop.f32.mrb[0].mxu0
    %v300 = vadd.f32 0.0, %v299
    %v301 = vpop.f32.mrb[0].mxu0
    %302 = vmatprep.mubr.f32.mxu0 0.0
    %303 = vmatmul.mubr.f32.gmra.mrb[0].mxu0 %v162
    %v304 = vpop.f32.mrb[0].mxu0
    %v305 = vadd.f32 0.0, %v304
    %v306 = vpop.f32.mrb[0].mxu0
    %307 = vmatprep.mubr.f32.mxu0 0.0
    %308 = vmatmul.mubr.f32.gmra.mrb[0].mxu0 %v163
    %v309 = vpop.f32.mrb[0].mxu0
    %v310 = vadd.f32 0.0, %v309
    %v311 = vpop.f32.mrb[0].mxu0
    %312 = vmatprep.mubr.f32.mxu0 0.0
    %313 = vmatmul.mubr.f32.gmra.mrb[0].mxu0 %v164
    %v314 = vpop.f32.mrb[0].mxu0
    %v315 = vadd.f32 0.0, %v314
    %v316 = vpop.f32.mrb[0].mxu0
    %317 = vmatprep.mubr.f32.mxu0 0.0
    %318 = vmatmul.mubr.f32.gmra.mrb[0].mxu0 %v165
    %v319 = vpop.f32.mrb[0].mxu0
    %v320 = vadd.f32 0.0, %v319
    %v321 = vpop.f32.mrb[0].mxu0
    %322 = vmatprep.mubr.f32.mxu0 0.0
    %323 = vmatmul.mubr.f32.gmra.mrb[0].mxu0 %v166
    %v324 = vpop.f32.mrb[0].mxu0
    %v325 = vadd.f32 0.0, %v324
    %v326 = vpop.f32.mrb[0].mxu0
    %327 = vdwg.mxu0
    %v328 = vadd.f32 %v135, %v250
    %v329 = vadd.f32 %v136, %v255
    %v330 = vadd.f32 %v137, %v260
    %v331 = vadd.f32 %v138, %v265
    %v332 = vadd.f32 %v139, %v270
    %v333 = vadd.f32 %v140, %v275
    %v334 = vadd.f32 %v141, %v280
    %v335 = vadd.f32 %v142, %v285
    %v336 = vadd.f32 %v143, %v290
    %v337 = vadd.f32 %v144, %v295
    %v338 = vadd.f32 %v145, %v300
    %v339 = vadd.f32 %v146, %v305
    %v340 = vadd.f32 %v147, %v310
    %v341 = vadd.f32 %v148, %v315
    %v342 = vadd.f32 %v149, %v320
    %v343 = vadd.f32 %v150, %v325
    %344 = vst [vmem:[#allocation2] sm:$0xff] %v328
    %345 = vst [vmem:[#allocation2 + $0x8] sm:$0xff] %v329
    %346 = vst [vmem:[#allocation2 + $0x10] sm:$0xff] %v330
    %347 = vst [vmem:[#allocation2 + $0x18] sm:$0xff] %v331
    %348 = vst [vmem:[#allocation2 + $0x20] sm:$0xff] %v332
    %349 = vst [vmem:[#allocation2 + $0x28] sm:$0xff] %v333
    %350 = vst [vmem:[#allocation2 + $0x30] sm:$0xff] %v334
    %351 = vst [vmem:[#allocation2 + $0x38] sm:$0xff] %v335
    %352 = vst [vmem:[#allocation2 + $0x40] sm:$0xff] %v336
    %353 = vst [vmem:[#allocation2 + $0x48] sm:$0xff] %v337
    %354 = vst [vmem:[#allocation2 + $0x50] sm:$0xff] %v338
    %355 = vst [vmem:[#allocation2 + $0x58] sm:$0xff] %v339
    %356 = vst [vmem:[#allocation2 + $0x60] sm:$0xff] %v340
    %357 = vst [vmem:[#allocation2 + $0x68] sm:$0xff] %v341
    %358 = vst [vmem:[#allocation2 + $0x70] sm:$0xff] %v342
    %359 = vst [vmem:[#allocation2 + $0x78] sm:$0xff] %v343
    // Predicated region
    $region66: #{tpu_custom_call.1} parent=1 // pred_check
      %p360 = pneg %p115
    $region67: #{tpu_custom_call.1} parent=1 // pred_check_branch
      %362 = sbr.rel (%p360) target = $region69
    $region68: #{tpu_custom_call.1} parent=1 // pred_region
      %v363 = vld [vmem:[#allocation2] sm:$0xff]
      %v364 = vld [vmem:[#allocation2 + $0x8] sm:$0xff]
      %v365 = vld [vmem:[#allocation2 + $0x10] sm:$0xff]
      %v366 = vld [vmem:[#allocation2 + $0x18] sm:$0xff]
      %v367 = vld [vmem:[#allocation2 + $0x20] sm:$0xff]
      %v368 = vld [vmem:[#allocation2 + $0x28] sm:$0xff]
      %v369 = vld [vmem:[#allocation2 + $0x30] sm:$0xff]
      %v370 = vld [vmem:[#allocation2 + $0x38] sm:$0xff]
      %v371 = vld [vmem:[#allocation2 + $0x40] sm:$0xff]
      %v372 = vld [vmem:[#allocation2 + $0x48] sm:$0xff]
      %v373 = vld [vmem:[#allocation2 + $0x50] sm:$0xff]
      %v374 = vld [vmem:[#allocation2 + $0x58] sm:$0xff]
      %v375 = vld [vmem:[#allocation2 + $0x60] sm:$0xff]
      %v376 = vld [vmem:[#allocation2 + $0x68] sm:$0xff]
      %v377 = vld [vmem:[#allocation2 + $0x70] sm:$0xff]
      %v378 = vld [vmem:[#allocation2 + $0x78] sm:$0xff]
      %v379 = vld [vmem:[#allocation9] sm:$0xff]
      %v380 = vld [vmem:[#allocation9 + $0x8] sm:$0xff]
      %v381 = vld [vmem:[#allocation9 + $0x10] sm:$0xff]
      %v382 = vld [vmem:[#allocation9 + $0x18] sm:$0xff]
      %v383 = vld [vmem:[#allocation9 + $0x20] sm:$0xff]
      %v384 = vld [vmem:[#allocation9 + $0x28] sm:$0xff]
      %v385 = vld [vmem:[#allocation9 + $0x30] sm:$0xff]
      %v386 = vld [vmem:[#allocation9 + $0x38] sm:$0xff]
      %v387 = vld [vmem:[#allocation9 + $0x40] sm:$0xff]
      %v388 = vld [vmem:[#allocation9 + $0x48] sm:$0xff]
      %v389 = vld [vmem:[#allocation9 + $0x50] sm:$0xff]
      %v390 = vld [vmem:[#allocation9 + $0x58] sm:$0xff]
      %v391 = vld [vmem:[#allocation9 + $0x60] sm:$0xff]
      %v392 = vld [vmem:[#allocation9 + $0x68] sm:$0xff]
      %v393 = vld [vmem:[#allocation9 + $0x70] sm:$0xff]
      %v394 = vld [vmem:[#allocation9 + $0x78] sm:$0xff]
      %v395 = vld [vmem:[%s4] sm:$0x1]
      %v397 = vlaneseq
      %v398 = vshrl.u32 %v397, 7
      %v399 = vsub.s32 0, %v398
      %v400 = vrot.slane %v395, %v399
      %402 = vmatprep.subr.mxu0 0.0
      %403 = vmatpush1.msra.mxu0 %v379
      %404 = vmatprep.subr.mxu0 0.0
      %405 = vmatpush1.msra.mxu0 %v380
      %406 = vmatprep.subr.mxu0 0.0
      %407 = vmatpush1.msra.mxu0 %v381
      %408 = vmatprep.subr.mxu0 0.0
      %409 = vmatpush1.msra.mxu0 %v382
      %410 = vmatprep.subr.mxu0 0.0
      %411 = vmatpush1.msra.mxu0 %v383
      %412 = vmatprep.subr.mxu0 0.0
      %413 = vmatpush1.msra.mxu0 %v384
      %414 = vmatprep.subr.mxu0 0.0
      %415 = vmatpush1.msra.mxu0 %v385
      %416 = vmatprep.subr.mxu0 0.0
      %417 = vmatpush1.msra.mxu0 %v386
      %418 = vmatprep.subr.mxu0 0.0
      %419 = vmatpush1.msra.mxu0 %v387
      %420 = vmatprep.subr.mxu0 0.0
      %421 = vmatpush1.msra.mxu0 %v388
      %422 = vmatprep.subr.mxu0 0.0
      %423 = vmatpush1.msra.mxu0 %v389
      %424 = vmatprep.subr.mxu0 0.0
      %425 = vmatpush1.msra.mxu0 %v390
      %426 = vmatprep.subr.mxu0 0.0
      %427 = vmatpush1.msra.mxu0 %v391
      %428 = vmatprep.subr.mxu0 0.0
      %429 = vmatpush1.msra.mxu0 %v392
      %430 = vmatprep.subr.mxu0 0.0
      %431 = vmatpush1.msra.mxu0 %v393
      %432 = vmatprep.subr.mxu0 0.0
      %433 = vmatpush1.msra.mxu0 %v394
      %434 = vmatprep.subr.mxu0 0.0
      %435 = vmatpush1.msra.mxu0 0.0
      %436 = vmatprep.subr.mxu0 0.0
      %437 = vmatpush1.msra.mxu0 0.0
      %438 = vmatprep.subr.mxu0 0.0
      %439 = vmatpush1.msra.mxu0 0.0
      %440 = vmatprep.subr.mxu0 0.0
      %441 = vmatpush1.msra.mxu0 0.0
      %442 = vmatprep.subr.mxu0 0.0
      %443 = vmatpush1.msra.mxu0 0.0
      %444 = vmatprep.subr.mxu0 0.0
      %445 = vmatpush1.msra.mxu0 0.0
      %446 = vmatprep.subr.mxu0 0.0
      %447 = vmatpush1.msra.mxu0 0.0
      %448 = vmatprep.subr.mxu0 0.0
      %449 = vmatpush1.msra.mxu0 0.0
      %450 = vmatprep.subr.mxu0 0.0
      %451 = vmatpush1.msra.mxu0 0.0
      %452 = vmatprep.subr.mxu0 0.0
      %453 = vmatpush1.msra.mxu0 0.0
      %454 = vmatprep.subr.mxu0 0.0
      %455 = vmatpush1.msra.mxu0 0.0
      %456 = vmatprep.subr.mxu0 0.0
      %457 = vmatpush1.msra.mxu0 0.0
      %458 = vmatprep.subr.mxu0 0.0
      %459 = vmatpush1.msra.mxu0 0.0
      %460 = vmatprep.subr.mxu0 0.0
      %461 = vmatpush1.msra.mxu0 0.0
      %462 = vmatprep.subr.mxu0 0.0
      %463 = vmatpush1.msra.mxu0 0.0
      %464 = vmatprep.subr.mxu0 0.0
      %465 = vmatpush1.msra.mxu0 0.0
      %466 = vmatprep.mubr.f32.mxu0 0.0
      %467 = vmatmul.mubr.f32.gmra.mrb[0].mxu0 %v363
      %v468 = vpop.f32.mrb[0].mxu0
      %v469 = vadd.f32 %v400, %v468
      %v470 = vpop.f32.mrb[0].mxu0
      %471 = vmatprep.mubr.f32.mxu0 0.0
      %472 = vmatmul.mubr.f32.gmra.mrb[0].mxu0 %v364
      %v473 = vpop.f32.mrb[0].mxu0
      %v474 = vadd.f32 %v400, %v473
      %v475 = vpop.f32.mrb[0].mxu0
      %476 = vmatprep.mubr.f32.mxu0 0.0
      %477 = vmatmul.mubr.f32.gmra.mrb[0].mxu0 %v365
      %v478 = vpop.f32.mrb[0].mxu0
      %v479 = vadd.f32 %v400, %v478
      %v480 = vpop.f32.mrb[0].mxu0
      %481 = vmatprep.mubr.f32.mxu0 0.0
      %482 = vmatmul.mubr.f32.gmra.mrb[0].mxu0 %v366
      %v483 = vpop.f32.mrb[0].mxu0
      %v484 = vadd.f32 %v400, %v483
      %v485 = vpop.f32.mrb[0].mxu0
      %486 = vmatprep.mubr.f32.mxu0 0.0
      %487 = vmatmul.mubr.f32.gmra.mrb[0].mxu0 %v367
      %v488 = vpop.f32.mrb[0].mxu0
      %v489 = vadd.f32 %v400, %v488
      %v490 = vpop.f32.mrb[0].mxu0
      %491 = vmatprep.mubr.f32.mxu0 0.0
      %492 = vmatmul.mubr.f32.gmra.mrb[0].mxu0 %v368
      %v493 = vpop.f32.mrb[0].mxu0
      %v494 = vadd.f32 %v400, %v493
      %v495 = vpop.f32.mrb[0].mxu0
      %496 = vmatprep.mubr.f32.mxu0 0.0
      %497 = vmatmul.mubr.f32.gmra.mrb[0].mxu0 %v369
      %v498 = vpop.f32.mrb[0].mxu0
      %v499 = vadd.f32 %v400, %v498
      %v500 = vpop.f32.mrb[0].mxu0
      %501 = vmatprep.mubr.f32.mxu0 0.0
      %502 = vmatmul.mubr.f32.gmra.mrb[0].mxu0 %v370
      %v503 = vpop.f32.mrb[0].mxu0
      %v504 = vadd.f32 %v400, %v503
      %v505 = vpop.f32.mrb[0].mxu0
      %506 = vmatprep.mubr.f32.mxu0 0.0
      %507 = vmatmul.mubr.f32.gmra.mrb[0].mxu0 %v371
      %v508 = vpop.f32.mrb[0].mxu0
      %v509 = vadd.f32 %v400, %v508
      %v510 = vpop.f32.mrb[0].mxu0
      %511 = vmatprep.mubr.f32.mxu0 0.0
      %512 = vmatmul.mubr.f32.gmra.mrb[0].mxu0 %v372
      %v513 = vpop.f32.mrb[0].mxu0
      %v514 = vadd.f32 %v400, %v513
      %v515 = vpop.f32.mrb[0].mxu0
      %516 = vmatprep.mubr.f32.mxu0 0.0
      %517 = vmatmul.mubr.f32.gmra.mrb[0].mxu0 %v373
      %v518 = vpop.f32.mrb[0].mxu0
      %v519 = vadd.f32 %v400, %v518
      %v520 = vpop.f32.mrb[0].mxu0
      %521 = vmatprep.mubr.f32.mxu0 0.0
      %522 = vmatmul.mubr.f32.gmra.mrb[0].mxu0 %v374
      %v523 = vpop.f32.mrb[0].mxu0
      %v524 = vadd.f32 %v400, %v523
      %v525 = vpop.f32.mrb[0].mxu0
      %526 = vmatprep.mubr.f32.mxu0 0.0
      %527 = vmatmul.mubr.f32.gmra.mrb[0].mxu0 %v375
      %v528 = vpop.f32.mrb[0].mxu0
      %v529 = vadd.f32 %v400, %v528
      %v530 = vpop.f32.mrb[0].mxu0
      %531 = vmatprep.mubr.f32.mxu0 0.0
      %532 = vmatmul.mubr.f32.gmra.mrb[0].mxu0 %v376
      %v533 = vpop.f32.mrb[0].mxu0
      %v534 = vadd.f32 %v400, %v533
      %v535 = vpop.f32.mrb[0].mxu0
      %536 = vmatprep.mubr.f32.mxu0 0.0
      %537 = vmatmul.mubr.f32.gmra.mrb[0].mxu0 %v377
      %v538 = vpop.f32.mrb[0].mxu0
      %v539 = vadd.f32 %v400, %v538
      %v540 = vpop.f32.mrb[0].mxu0
      %541 = vmatprep.mubr.f32.mxu0 0.0
      %542 = vmatmul.mubr.f32.gmra.mrb[0].mxu0 %v378
      %v543 = vpop.f32.mrb[0].mxu0
      %v544 = vadd.f32 %v400, %v543
      %v545 = vpop.f32.mrb[0].mxu0
      %546 = vdwg.mxu0
      %v547 = vmax.f32 %v469, 0.0
      %v548 = vmax.f32 %v474, 0.0
      %v549 = vmax.f32 %v479, 0.0
      %v550 = vmax.f32 %v484, 0.0
      %v551 = vmax.f32 %v489, 0.0
      %v552 = vmax.f32 %v494, 0.0
      %v553 = vmax.f32 %v499, 0.0
      %v554 = vmax.f32 %v504, 0.0
      %v555 = vmax.f32 %v509, 0.0
      %v556 = vmax.f32 %v514, 0.0
      %v557 = vmax.f32 %v519, 0.0
      %v558 = vmax.f32 %v524, 0.0
      %v559 = vmax.f32 %v529, 0.0
      %v560 = vmax.f32 %v534, 0.0
      %v561 = vmax.f32 %v539, 0.0
      %v562 = vmax.f32 %v544, 0.0
      %v563 = vld [vmem:[#allocation11] sm:$0xff]
      %v564 = vld [vmem:[#allocation11 + $0x8] sm:$0xff]
      %v565 = vld [vmem:[#allocation11 + $0x10] sm:$0xff]
      %v566 = vld [vmem:[#allocation11 + $0x18] sm:$0xff]
      %v567 = vld [vmem:[#allocation11 + $0x20] sm:$0xff]
      %v568 = vld [vmem:[#allocation11 + $0x28] sm:$0xff]
      %v569 = vld [vmem:[#allocation11 + $0x30] sm:$0xff]
      %v570 = vld [vmem:[#allocation11 + $0x38] sm:$0xff]
      %v571 = vld [vmem:[#allocation11 + $0x40] sm:$0xff]
      %v572 = vld [vmem:[#allocation11 + $0x48] sm:$0xff]
      %v573 = vld [vmem:[#allocation11 + $0x50] sm:$0xff]
      %v574 = vld [vmem:[#allocation11 + $0x58] sm:$0xff]
      %v575 = vld [vmem:[#allocation11 + $0x60] sm:$0xff]
      %v576 = vld [vmem:[#allocation11 + $0x68] sm:$0xff]
      %v577 = vld [vmem:[#allocation11 + $0x70] sm:$0xff]
      %v578 = vld [vmem:[#allocation11 + $0x78] sm:$0xff]
      %v579 = vld [vmem:[%s6] sm:$0x1]
      %v581 = vlaneseq
      %v582 = vshrl.u32 %v581, 7
      %v583 = vsub.s32 0, %v582
      %v584 = vrot.slane %v579, %v583
      %586 = vmatprep.subr.mxu0 0.0
      %587 = vmatpush1.msra.mxu0 %v563
      %588 = vmatprep.subr.mxu0 0.0
      %589 = vmatpush1.msra.mxu0 %v564
      %590 = vmatprep.subr.mxu0 0.0
      %591 = vmatpush1.msra.mxu0 %v565
      %592 = vmatprep.subr.mxu0 0.0
      %593 = vmatpush1.msra.mxu0 %v566
      %594 = vmatprep.subr.mxu0 0.0
      %595 = vmatpush1.msra.mxu0 %v567
      %596 = vmatprep.subr.mxu0 0.0
      %597 = vmatpush1.msra.mxu0 %v568
      %598 = vmatprep.subr.mxu0 0.0
      %599 = vmatpush1.msra.mxu0 %v569
      %600 = vmatprep.subr.mxu0 0.0
      %601 = vmatpush1.msra.mxu0 %v570
      %602 = vmatprep.subr.mxu0 0.0
      %603 = vmatpush1.msra.mxu0 %v571
      %604 = vmatprep.subr.mxu0 0.0
      %605 = vmatpush1.msra.mxu0 %v572
      %606 = vmatprep.subr.mxu0 0.0
      %607 = vmatpush1.msra.mxu0 %v573
      %608 = vmatprep.subr.mxu0 0.0
      %609 = vmatpush1.msra.mxu0 %v574
      %610 = vmatprep.subr.mxu0 0.0
      %611 = vmatpush1.msra.mxu0 %v575
      %612 = vmatprep.subr.mxu0 0.0
      %613 = vmatpush1.msra.mxu0 %v576
      %614 = vmatprep.subr.mxu0 0.0
      %615 = vmatpush1.msra.mxu0 %v577
      %616 = vmatprep.subr.mxu0 0.0
      %617 = vmatpush1.msra.mxu0 %v578
      %618 = vmatprep.subr.mxu0 0.0
      %619 = vmatpush1.msra.mxu0 0.0
      %620 = vmatprep.subr.mxu0 0.0
      %621 = vmatpush1.msra.mxu0 0.0
      %622 = vmatprep.subr.mxu0 0.0
      %623 = vmatpush1.msra.mxu0 0.0
      %624 = vmatprep.subr.mxu0 0.0
      %625 = vmatpush1.msra.mxu0 0.0
      %626 = vmatprep.subr.mxu0 0.0
      %627 = vmatpush1.msra.mxu0 0.0
      %628 = vmatprep.subr.mxu0 0.0
      %629 = vmatpush1.msra.mxu0 0.0
      %630 = vmatprep.subr.mxu0 0.0
      %631 = vmatpush1.msra.mxu0 0.0
      %632 = vmatprep.subr.mxu0 0.0
      %633 = vmatpush1.msra.mxu0 0.0
      %634 = vmatprep.subr.mxu0 0.0
      %635 = vmatpush1.msra.mxu0 0.0
      %636 = vmatprep.subr.mxu0 0.0
      %637 = vmatpush1.msra.mxu0 0.0
      %638 = vmatprep.subr.mxu0 0.0
      %639 = vmatpush1.msra.mxu0 0.0
      %640 = vmatprep.subr.mxu0 0.0
      %641 = vmatpush1.msra.mxu0 0.0
      %642 = vmatprep.subr.mxu0 0.0
      %643 = vmatpush1.msra.mxu0 0.0
      %644 = vmatprep.subr.mxu0 0.0
      %645 = vmatpush1.msra.mxu0 0.0
      %646 = vmatprep.subr.mxu0 0.0
      %647 = vmatpush1.msra.mxu0 0.0
      %648 = vmatprep.subr.mxu0 0.0
      %649 = vmatpush1.msra.mxu0 0.0
      %650 = vmatprep.mubr.f32.mxu0 0.0
      %651 = vmatmul.mubr.f32.gmra.mrb[0].mxu0 %v547
      %v652 = vpop.f32.mrb[0].mxu0
      %v653 = vadd.f32 %v584, %v652
      %v654 = vpop.f32.mrb[0].mxu0
      %655 = vmatprep.mubr.f32.mxu0 0.0
      %656 = vmatmul.mubr.f32.gmra.mrb[0].mxu0 %v548
      %v657 = vpop.f32.mrb[0].mxu0
      %v658 = vadd.f32 %v584, %v657
      %v659 = vpop.f32.mrb[0].mxu0
      %660 = vmatprep.mubr.f32.mxu0 0.0
      %661 = vmatmul.mubr.f32.gmra.mrb[0].mxu0 %v549
      %v662 = vpop.f32.mrb[0].mxu0
      %v663 = vadd.f32 %v584, %v662
      %v664 = vpop.f32.mrb[0].mxu0
      %665 = vmatprep.mubr.f32.mxu0 0.0
      %666 = vmatmul.mubr.f32.gmra.mrb[0].mxu0 %v550
      %v667 = vpop.f32.mrb[0].mxu0
      %v668 = vadd.f32 %v584, %v667
      %v669 = vpop.f32.mrb[0].mxu0
      %670 = vmatprep.mubr.f32.mxu0 0.0
      %671 = vmatmul.mubr.f32.gmra.mrb[0].mxu0 %v551
      %v672 = vpop.f32.mrb[0].mxu0
      %v673 = vadd.f32 %v584, %v672
      %v674 = vpop.f32.mrb[0].mxu0
      %675 = vmatprep.mubr.f32.mxu0 0.0
      %676 = vmatmul.mubr.f32.gmra.mrb[0].mxu0 %v552
      %v677 = vpop.f32.mrb[0].mxu0
      %v678 = vadd.f32 %v584, %v677
      %v679 = vpop.f32.mrb[0].mxu0
      %680 = vmatprep.mubr.f32.mxu0 0.0
      %681 = vmatmul.mubr.f32.gmra.mrb[0].mxu0 %v553
      %v682 = vpop.f32.mrb[0].mxu0
      %v683 = vadd.f32 %v584, %v682
      %v684 = vpop.f32.mrb[0].mxu0
      %685 = vmatprep.mubr.f32.mxu0 0.0
      %686 = vmatmul.mubr.f32.gmra.mrb[0].mxu0 %v554
      %v687 = vpop.f32.mrb[0].mxu0
      %v688 = vadd.f32 %v584, %v687
      %v689 = vpop.f32.mrb[0].mxu0
      %690 = vmatprep.mubr.f32.mxu0 0.0
      %691 = vmatmul.mubr.f32.gmra.mrb[0].mxu0 %v555
      %v692 = vpop.f32.mrb[0].mxu0
      %v693 = vadd.f32 %v584, %v692
      %v694 = vpop.f32.mrb[0].mxu0
      %695 = vmatprep.mubr.f32.mxu0 0.0
      %696 = vmatmul.mubr.f32.gmra.mrb[0].mxu0 %v556
      %v697 = vpop.f32.mrb[0].mxu0
      %v698 = vadd.f32 %v584, %v697
      %v699 = vpop.f32.mrb[0].mxu0
      %700 = vmatprep.mubr.f32.mxu0 0.0
      %701 = vmatmul.mubr.f32.gmra.mrb[0].mxu0 %v557
      %v702 = vpop.f32.mrb[0].mxu0
      %v703 = vadd.f32 %v584, %v702
      %v704 = vpop.f32.mrb[0].mxu0
      %705 = vmatprep.mubr.f32.mxu0 0.0
      %706 = vmatmul.mubr.f32.gmra.mrb[0].mxu0 %v558
      %v707 = vpop.f32.mrb[0].mxu0
      %v708 = vadd.f32 %v584, %v707
      %v709 = vpop.f32.mrb[0].mxu0
      %710 = vmatprep.mubr.f32.mxu0 0.0
      %711 = vmatmul.mubr.f32.gmra.mrb[0].mxu0 %v559
      %v712 = vpop.f32.mrb[0].mxu0
      %v713 = vadd.f32 %v584, %v712
      %v714 = vpop.f32.mrb[0].mxu0
      %715 = vmatprep.mubr.f32.mxu0 0.0
      %716 = vmatmul.mubr.f32.gmra.mrb[0].mxu0 %v560
      %v717 = vpop.f32.mrb[0].mxu0
      %v718 = vadd.f32 %v584, %v717
      %v719 = vpop.f32.mrb[0].mxu0
      %720 = vmatprep.mubr.f32.mxu0 0.0
      %721 = vmatmul.mubr.f32.gmra.mrb[0].mxu0 %v561
      %v722 = vpop.f32.mrb[0].mxu0
      %v723 = vadd.f32 %v584, %v722
      %v724 = vpop.f32.mrb[0].mxu0
      %725 = vmatprep.mubr.f32.mxu0 0.0
      %726 = vmatmul.mubr.f32.gmra.mrb[0].mxu0 %v562
      %v727 = vpop.f32.mrb[0].mxu0
      %v728 = vadd.f32 %v584, %v727
      %v729 = vpop.f32.mrb[0].mxu0
      %730 = vdwg.mxu0
      %v731 = vld [vmem:[#allocation8] sm:$0xff]
      %v732 = vld [vmem:[#allocation8 + $0x8] sm:$0xff]
      %v733 = vld [vmem:[#allocation8 + $0x10] sm:$0xff]
      %v734 = vld [vmem:[#allocation8 + $0x18] sm:$0xff]
      %v735 = vld [vmem:[#allocation8 + $0x20] sm:$0xff]
      %v736 = vld [vmem:[#allocation8 + $0x28] sm:$0xff]
      %v737 = vld [vmem:[#allocation8 + $0x30] sm:$0xff]
      %v738 = vld [vmem:[#allocation8 + $0x38] sm:$0xff]
      %v739 = vld [vmem:[#allocation8 + $0x40] sm:$0xff]
      %v740 = vld [vmem:[#allocation8 + $0x48] sm:$0xff]
      %v741 = vld [vmem:[#allocation8 + $0x50] sm:$0xff]
      %v742 = vld [vmem:[#allocation8 + $0x58] sm:$0xff]
      %v743 = vld [vmem:[#allocation8 + $0x60] sm:$0xff]
      %v744 = vld [vmem:[#allocation8 + $0x68] sm:$0xff]
      %v745 = vld [vmem:[#allocation8 + $0x70] sm:$0xff]
      %v746 = vld [vmem:[#allocation8 + $0x78] sm:$0xff]
      %v747 = vld [vmem:[#allocation12] sm:$0xff]
      %v748 = vld [vmem:[#allocation12 + $0x8] sm:$0xff]
      %v749 = vld [vmem:[#allocation12 + $0x10] sm:$0xff]
      %v750 = vld [vmem:[#allocation12 + $0x18] sm:$0xff]
      %v751 = vld [vmem:[#allocation12 + $0x20] sm:$0xff]
      %v752 = vld [vmem:[#allocation12 + $0x28] sm:$0xff]
      %v753 = vld [vmem:[#allocation12 + $0x30] sm:$0xff]
      %v754 = vld [vmem:[#allocation12 + $0x38] sm:$0xff]
      %v755 = vld [vmem:[#allocation12 + $0x40] sm:$0xff]
      %v756 = vld [vmem:[#allocation12 + $0x48] sm:$0xff]
      %v757 = vld [vmem:[#allocation12 + $0x50] sm:$0xff]
      %v758 = vld [vmem:[#allocation12 + $0x58] sm:$0xff]
      %v759 = vld [vmem:[#allocation12 + $0x60] sm:$0xff]
      %v760 = vld [vmem:[#allocation12 + $0x68] sm:$0xff]
      %v761 = vld [vmem:[#allocation12 + $0x70] sm:$0xff]
      %v762 = vld [vmem:[#allocation12 + $0x78] sm:$0xff]
      %763 = vmatprep.subr.mxu0 0.0
      %764 = vmatpush1.msra.mxu0 %v747
      %765 = vmatprep.subr.mxu0 0.0
      %766 = vmatpush1.msra.mxu0 %v748
      %767 = vmatprep.subr.mxu0 0.0
      %768 = vmatpush1.msra.mxu0 %v749
      %769 = vmatprep.subr.mxu0 0.0
      %770 = vmatpush1.msra.mxu0 %v750
      %771 = vmatprep.subr.mxu0 0.0
      %772 = vmatpush1.msra.mxu0 %v751
      %773 = vmatprep.subr.mxu0 0.0
      %774 = vmatpush1.msra.mxu0 %v752
      %775 = vmatprep.subr.mxu0 0.0
      %776 = vmatpush1.msra.mxu0 %v753
      %777 = vmatprep.subr.mxu0 0.0
      %778 = vmatpush1.msra.mxu0 %v754
      %779 = vmatprep.subr.mxu0 0.0
      %780 = vmatpush1.msra.mxu0 %v755
      %781 = vmatprep.subr.mxu0 0.0
      %782 = vmatpush1.msra.mxu0 %v756
      %783 = vmatprep.subr.mxu0 0.0
      %784 = vmatpush1.msra.mxu0 %v757
      %785 = vmatprep.subr.mxu0 0.0
      %786 = vmatpush1.msra.mxu0 %v758
      %787 = vmatprep.subr.mxu0 0.0
      %788 = vmatpush1.msra.mxu0 %v759
      %789 = vmatprep.subr.mxu0 0.0
      %790 = vmatpush1.msra.mxu0 %v760
      %791 = vmatprep.subr.mxu0 0.0
      %792 = vmatpush1.msra.mxu0 %v761
      %793 = vmatprep.subr.mxu0 0.0
      %794 = vmatpush1.msra.mxu0 %v762
      %795 = vmatprep.subr.mxu0 0.0
      %796 = vmatpush1.msra.mxu0 0.0
      %797 = vmatprep.subr.mxu0 0.0
      %798 = vmatpush1.msra.mxu0 0.0
      %799 = vmatprep.subr.mxu0 0.0
      %800 = vmatpush1.msra.mxu0 0.0
      %801 = vmatprep.subr.mxu0 0.0
      %802 = vmatpush1.msra.mxu0 0.0
      %803 = vmatprep.subr.mxu0 0.0
      %804 = vmatpush1.msra.mxu0 0.0
      %805 = vmatprep.subr.mxu0 0.0
      %806 = vmatpush1.msra.mxu0 0.0
      %807 = vmatprep.subr.mxu0 0.0
      %808 = vmatpush1.msra.mxu0 0.0
      %809 = vmatprep.subr.mxu0 0.0
      %810 = vmatpush1.msra.mxu0 0.0
      %811 = vmatprep.subr.mxu0 0.0
      %812 = vmatpush1.msra.mxu0 0.0
      %813 = vmatprep.subr.mxu0 0.0
      %814 = vmatpush1.msra.mxu0 0.0
      %815 = vmatprep.subr.mxu0 0.0
      %816 = vmatpush1.msra.mxu0 0.0
      %817 = vmatprep.subr.mxu0 0.0
      %818 = vmatpush1.msra.mxu0 0.0
      %819 = vmatprep.subr.mxu0 0.0
      %820 = vmatpush1.msra.mxu0 0.0
      %821 = vmatprep.subr.mxu0 0.0
      %822 = vmatpush1.msra.mxu0 0.0
      %823 = vmatprep.subr.mxu0 0.0
      %824 = vmatpush1.msra.mxu0 0.0
      %825 = vmatprep.subr.mxu0 0.0
      %826 = vmatpush1.msra.mxu0 0.0
      %827 = vmatprep.mubr.f32.mxu0 0.0
      %828 = vmatmul.mubr.f32.gmra.mrb[0].mxu0 %v731
      %v829 = vpop.f32.mrb[0].mxu0
      %v830 = vadd.f32 0.0, %v829
      %v831 = vpop.f32.mrb[0].mxu0
      %832 = vmatprep.mubr.f32.mxu0 0.0
      %833 = vmatmul.mubr.f32.gmra.mrb[0].mxu0 %v732
      %v834 = vpop.f32.mrb[0].mxu0
      %v835 = vadd.f32 0.0, %v834
      %v836 = vpop.f32.mrb[0].mxu0
      %837 = vmatprep.mubr.f32.mxu0 0.0
      %838 = vmatmul.mubr.f32.gmra.mrb[0].mxu0 %v733
      %v839 = vpop.f32.mrb[0].mxu0
      %v840 = vadd.f32 0.0, %v839
      %v841 = vpop.f32.mrb[0].mxu0
      %842 = vmatprep.mubr.f32.mxu0 0.0
      %843 = vmatmul.mubr.f32.gmra.mrb[0].mxu0 %v734
      %v844 = vpop.f32.mrb[0].mxu0
      %v845 = vadd.f32 0.0, %v844
      %v846 = vpop.f32.mrb[0].mxu0
      %847 = vmatprep.mubr.f32.mxu0 0.0
      %848 = vmatmul.mubr.f32.gmra.mrb[0].mxu0 %v735
      %v849 = vpop.f32.mrb[0].mxu0
      %v850 = vadd.f32 0.0, %v849
      %v851 = vpop.f32.mrb[0].mxu0
      %852 = vmatprep.mubr.f32.mxu0 0.0
      %853 = vmatmul.mubr.f32.gmra.mrb[0].mxu0 %v736
      %v854 = vpop.f32.mrb[0].mxu0
      %v855 = vadd.f32 0.0, %v854
      %v856 = vpop.f32.mrb[0].mxu0
      %857 = vmatprep.mubr.f32.mxu0 0.0
      %858 = vmatmul.mubr.f32.gmra.mrb[0].mxu0 %v737
      %v859 = vpop.f32.mrb[0].mxu0
      %v860 = vadd.f32 0.0, %v859
      %v861 = vpop.f32.mrb[0].mxu0
      %862 = vmatprep.mubr.f32.mxu0 0.0
      %863 = vmatmul.mubr.f32.gmra.mrb[0].mxu0 %v738
      %v864 = vpop.f32.mrb[0].mxu0
      %v865 = vadd.f32 0.0, %v864
      %v866 = vpop.f32.mrb[0].mxu0
      %867 = vmatprep.mubr.f32.mxu0 0.0
      %868 = vmatmul.mubr.f32.gmra.mrb[0].mxu0 %v739
      %v869 = vpop.f32.mrb[0].mxu0
      %v870 = vadd.f32 0.0, %v869
      %v871 = vpop.f32.mrb[0].mxu0
      %872 = vmatprep.mubr.f32.mxu0 0.0
      %873 = vmatmul.mubr.f32.gmra.mrb[0].mxu0 %v740
      %v874 = vpop.f32.mrb[0].mxu0
      %v875 = vadd.f32 0.0, %v874
      %v876 = vpop.f32.mrb[0].mxu0
      %877 = vmatprep.mubr.f32.mxu0 0.0
      %878 = vmatmul.mubr.f32.gmra.mrb[0].mxu0 %v741
      %v879 = vpop.f32.mrb[0].mxu0
      %v880 = vadd.f32 0.0, %v879
      %v881 = vpop.f32.mrb[0].mxu0
      %882 = vmatprep.mubr.f32.mxu0 0.0
      %883 = vmatmul.mubr.f32.gmra.mrb[0].mxu0 %v742
      %v884 = vpop.f32.mrb[0].mxu0
      %v885 = vadd.f32 0.0, %v884
      %v886 = vpop.f32.mrb[0].mxu0
      %887 = vmatprep.mubr.f32.mxu0 0.0
      %888 = vmatmul.mubr.f32.gmra.mrb[0].mxu0 %v743
      %v889 = vpop.f32.mrb[0].mxu0
      %v890 = vadd.f32 0.0, %v889
      %v891 = vpop.f32.mrb[0].mxu0
      %892 = vmatprep.mubr.f32.mxu0 0.0
      %893 = vmatmul.mubr.f32.gmra.mrb[0].mxu0 %v744
      %v894 = vpop.f32.mrb[0].mxu0
      %v895 = vadd.f32 0.0, %v894
      %v896 = vpop.f32.mrb[0].mxu0
      %897 = vmatprep.mubr.f32.mxu0 0.0
      %898 = vmatmul.mubr.f32.gmra.mrb[0].mxu0 %v745
      %v899 = vpop.f32.mrb[0].mxu0
      %v900 = vadd.f32 0.0, %v899
      %v901 = vpop.f32.mrb[0].mxu0
      %902 = vmatprep.mubr.f32.mxu0 0.0
      %903 = vmatmul.mubr.f32.gmra.mrb[0].mxu0 %v746
      %v904 = vpop.f32.mrb[0].mxu0
      %v905 = vadd.f32 0.0, %v904
      %v906 = vpop.f32.mrb[0].mxu0
      %907 = vdwg.mxu0
      %v908 = vadd.f32 %v653, %v830
      %v909 = vadd.f32 %v658, %v835
      %v910 = vadd.f32 %v663, %v840
      %v911 = vadd.f32 %v668, %v845
      %v912 = vadd.f32 %v673, %v850
      %v913 = vadd.f32 %v678, %v855
      %v914 = vadd.f32 %v683, %v860
      %v915 = vadd.f32 %v688, %v865
      %v916 = vadd.f32 %v693, %v870
      %v917 = vadd.f32 %v698, %v875
      %v918 = vadd.f32 %v703, %v880
      %v919 = vadd.f32 %v708, %v885
      %v920 = vadd.f32 %v713, %v890
      %v921 = vadd.f32 %v718, %v895
      %v922 = vadd.f32 %v723, %v900
      %v923 = vadd.f32 %v728, %v905
      %v924 = vld [vmem:[%s8] sm:$0x1]
      %v926 = vlaneseq
      %v927 = vshrl.u32 %v926, 7
      %v928 = vsub.s32 0, %v927
      %v929 = vrot.slane %v924, %v928
      %v931 = vadd.f32 %v908, %v929
      %v932 = vadd.f32 %v909, %v929
      %v933 = vadd.f32 %v910, %v929
      %v934 = vadd.f32 %v911, %v929
      %v935 = vadd.f32 %v912, %v929
      %v936 = vadd.f32 %v913, %v929
      %v937 = vadd.f32 %v914, %v929
      %v938 = vadd.f32 %v915, %v929
      %v939 = vadd.f32 %v916, %v929
      %v940 = vadd.f32 %v917, %v929
      %v941 = vadd.f32 %v918, %v929
      %v942 = vadd.f32 %v919, %v929
      %v943 = vadd.f32 %v920, %v929
      %v944 = vadd.f32 %v921, %v929
      %v945 = vadd.f32 %v922, %v929
      %v946 = vadd.f32 %v923, %v929
      %947 = vst [vmem:[#allocation14] sm:$0xff] %v931
      %948 = vst [vmem:[#allocation14 + $0x8] sm:$0xff] %v932
      %949 = vst [vmem:[#allocation14 + $0x10] sm:$0xff] %v933
      %950 = vst [vmem:[#allocation14 + $0x18] sm:$0xff] %v934
      %951 = vst [vmem:[#allocation14 + $0x20] sm:$0xff] %v935
      %952 = vst [vmem:[#allocation14 + $0x28] sm:$0xff] %v936
      %953 = vst [vmem:[#allocation14 + $0x30] sm:$0xff] %v937
      %954 = vst [vmem:[#allocation14 + $0x38] sm:$0xff] %v938
      %955 = vst [vmem:[#allocation14 + $0x40] sm:$0xff] %v939
      %956 = vst [vmem:[#allocation14 + $0x48] sm:$0xff] %v940
      %957 = vst [vmem:[#allocation14 + $0x50] sm:$0xff] %v941
      %958 = vst [vmem:[#allocation14 + $0x58] sm:$0xff] %v942
      %959 = vst [vmem:[#allocation14 + $0x60] sm:$0xff] %v943
      %960 = vst [vmem:[#allocation14 + $0x68] sm:$0xff] %v944
      %961 = vst [vmem:[#allocation14 + $0x70] sm:$0xff] %v945
      %962 = vst [vmem:[#allocation14 + $0x78] sm:$0xff] %v946
    $region69: #{tpu_custom_call.1} parent=1 // pred_fallthru
      _
    // Predicated region
    $region70: #{tpu_custom_call.1} parent=1 // pred_check
      _
    $region71: #{tpu_custom_call.1} parent=1 // pred_check_branch
      %964 = sbr.rel (0) target = $region73
    $region72: #{tpu_custom_call.1} parent=1 // pred_region
      %s966 = ssub.s32 2048, 2048
      %967 = vsyncadd [#allocation5], %s966
      %s968 = sshll.u32 [#allocation14], 4
      %s969 = int_to_ptr.vmem [resolvable:$true] %s968
      %974 = dma.vmem_to_hbm [thread:$0]  %s969, 2048, %s9, [#allocation5], 128, 128, 8
    $region73: #{tpu_custom_call.1} parent=1 // pred_fallthru
      _
    // Predicated region
    $region74: #{tpu_custom_call.1} parent=1 // pred_check
      _
    $region75: #{tpu_custom_call.1} parent=1 // pred_check_branch
      %976 = sbr.rel (0) target = $region77
    $region76: #{tpu_custom_call.1} parent=1 // pred_region
      %977 = dma.done [#allocation5], 2048
    $region77: #{tpu_custom_call.1} parent=1 // pred_fallthru
      _
    %978 = vsyncpa [#allocation4], 1
    %979 = vsyncpa [#allocation7], 1
    %980 = vsyncpa [#allocation10], 1
    %981 = vsyncpa [#allocation13], 1
    %982 = vsyncpa [#allocation5], 1

</llo_original>
